<compile_context>
chip_gen: v7x
topology: tpu7x:2x2x1
jax: 0.10.0
libtpu: 0.0.40
codegen_flags: <defaults>
</compile_context>

<pallas_src>
import functools

import numpy as np
import jax
import jax.numpy as jnp
from jax import lax
from jax.experimental import pallas as pl
from jax.experimental.pallas import tpu as pltpu

_LANES = 128


# ----------------------------------------------------------------------------
# Fused kernel: match-cost + threshold / label / keep -------------------------
# ----------------------------------------------------------------------------
def _match_detect_kernel(boxes_ref, meta_ref, det_cols_ref, out_ref, *, K, B):
    # boxes_ref    : ((K+1)*B, D) f32  rows [0,B) = ego boxes, rest = com-pair boxes
    # meta_ref     : (8, 128)    f32  r0 det_src, r1 det_tgt, r2 def_src, r3 def_tgt,
    #                                 r4 threshold, r5 attack_src, r6 attack_tgt
    #                                 (rows lane-dense, sentinel padded, lane-broadcast scalars)
    # det_cols_ref : (K, 2)      f32  det pairs as columns (src, tgt)
    # out_ref      : (4, 128)    f32  r0 cost, r1 pred, r2 label, r3 keep
    D = boxes_ref.shape[1]
    KB = K * B

    ego = boxes_ref[0:B, :]                         # (B, D)   static view
    others = boxes_ref[B:B + KB, :]                 # (KB, D)  static view

    # --- pairwise squared-L2, flipped orientation (B sublanes, KB lanes) -----
    gram = lax.dot_general(ego, others, (((1,), (1,)), ((), ())),
                           preferred_element_type=jnp.float32)          # (B, KB)
    e_sq = jnp.sum(ego * ego, axis=1, keepdims=True)                    # (B, 1)
    o_sq = lax.dot_general(jnp.ones((1, D), jnp.float32), others * others,
                           (((1,), (1,)), ((), ())),
                           preferred_element_type=jnp.float32)          # (1, KB) lane-dense
    pair_cost = jnp.maximum(e_sq + o_sq - 2.0 * gram, 0.0)              # (B, KB)

    # greedy min over ego boxes: sublane reduce -> lane-dense (1, KB)
    # TODO(synk): HungarianMatcherV2 does optimal one-to-one assignment over a
    # cls+reg+giou cost; greedy per-box row-min over L2 is the stand-in here.
    row_min = jnp.min(pair_cost, axis=0, keepdims=True)                 # (1, KB)

    # per-com-pair mean via one selector matmul -> lane-dense (1, 128)
    row_id = lax.broadcasted_iota(jnp.int32, (KB, 1), 0)                # (KB, 1)
    lane_id = lax.broadcasted_iota(jnp.int32, (1, _LANES), 1)           # (1, 128)
    in_grp = jnp.logical_and(row_id >= lane_id * B, row_id < (lane_id + 1) * B)
    sel = jnp.where(in_grp, jnp.float32(1.0 / B), jnp.float32(0.0))     # (KB, 128)
    costs = lax.dot_general(row_min, sel, (((1,), (0,)), ((), ())),
                            preferred_element_type=jnp.float32)         # (1, 128)

    # --- detect: threshold / label / rm_com_pair keep mask -------------------
    meta = meta_ref[...]                                                # (8, 128), one vreg
    det_src = meta[0:1, :]
    det_tgt = meta[1:2, :]
    def_src = meta[2:3, :]
    def_tgt = meta[3:4, :]
    thr_row = meta[4:5, :]
    att_src = meta[5:6, :]
    att_tgt = meta[6:7, :]

    valid_k = lane_id < K
    # strict '>' to match the PyTorch reference (match_costs > threshold)
    pred = jnp.logical_and(costs > thr_row, valid_k)                    # (1, 128)
    pred_f = pred.astype(jnp.float32)

    label_f = jnp.where(jnp.logical_and(det_src == att_src, det_tgt == att_tgt),
                        1.0, 0.0).astype(jnp.float32)                   # (1, 128)

    # keep[p] = NOT exists k: (def pair p == det pair k) AND pred[k]
    det_cols = det_cols_ref[...]                                        # (K, 2)
    d_src_col = det_cols[:, 0:1]                                        # (K, 1)
    d_tgt_col = det_cols[:, 1:2]                                        # (K, 1)
    match = jnp.where(jnp.logical_and(d_src_col == def_src, d_tgt_col == def_tgt),
                      1.0, 0.0).astype(jnp.float32)                     # (K, 128)
    removed = lax.dot_general(pred_f[:, 0:K], match, (((1,), (0,)), ((), ())),
                              preferred_element_type=jnp.float32)       # (1, 128)
    keep_f = jnp.where(removed > 0.5, 0.0, 1.0).astype(jnp.float32)     # (1, 128)

    # --- single packed lane-dense store --------------------------------------
    rows = lax.broadcasted_iota(jnp.int32, (4, _LANES), 0)
    out_ref[...] = jnp.where(rows == 0, costs,
                    jnp.where(rows == 1, pred_f,
                     jnp.where(rows == 2, label_f, keep_f)))


@functools.partial(jax.jit, static_argnames=("K", "B"))
def _device_forward(boxes, meta, det_cols, *, K, B):
    # boxes: (S, (K+1)*B, D) — S detection scenarios batched over a parallel grid.
    S, N, D = boxes.shape
    kernel = functools.partial(_match_detect_kernel, K=K, B=B)
    return pl.pallas_call(
        kernel,
        out_shape=jax.ShapeDtypeStruct((S, 4, _LANES), jnp.float32),
        grid=(S,),
        in_specs=[
            pl.BlockSpec((None, N, D), lambda s: (s, 0, 0)),      # per-scenario boxes
            pl.BlockSpec((8, _LANES), lambda s: (0, 0)),          # shared metadata vreg
            pl.BlockSpec((K, 2), lambda s: (0, 0)),               # shared det-pair columns
        ],
        out_specs=pl.BlockSpec((None, 4, _LANES), lambda s: (s, 0, 0)),
        compiler_params=pltpu.CompilerParams(
            dimension_semantics=("parallel",)),                   # shards across v7x TCs
    )(boxes, meta, det_cols)


# ----------------------------------------------------------------------------
# Host-side metadata packing ---------------------------------------------------
# ----------------------------------------------------------------------------
def _pack_meta(det_src, det_tgt, def_src, def_tgt, attack_src, attack_tgt, threshold):
    det_src = np.asarray(det_src, np.float32).reshape(-1)
    det_tgt = np.asarray(det_tgt, np.float32).reshape(-1)
    def_src = np.asarray(def_src, np.float32).reshape(-1)
    def_tgt = np.asarray(def_tgt, np.float32).reshape(-1)
    K = det_src.shape[0]
    P = def_src.shape[0]
    assert K <= _LANES and P <= _LANES
    meta = np.zeros((8, _LANES), np.float32)
    meta[0, :] = -1.0; meta[0, :K] = det_src
    meta[1, :] = -1.0; meta[1, :K] = det_tgt
    meta[2, :] = -2.0; meta[2, :P] = def_src
    meta[3, :] = -2.0; meta[3, :P] = def_tgt
    meta[4, :] = np.float32(threshold)
    meta[5, :] = np.float32(attack_src)
    meta[6, :] = np.float32(attack_tgt)
    det_cols = np.stack([det_src, det_tgt], axis=1).astype(np.float32)   # (K, 2)
    return jnp.asarray(meta), jnp.asarray(det_cols)


# ----------------------------------------------------------------------------
# Module -----------------------------------------------------------------------
# ----------------------------------------------------------------------------
class MatchCostDetectorRM1:
    def __init__(self):
        # TODO(synk): original loads match_costs_rm1_validation.npy; use a
        # deterministic synthetic calibration set and take its 95th percentile.
        rng = np.random.RandomState(0)
        calibration = rng.gamma(shape=2.0, scale=4.0, size=2048).astype(np.float32)
        self.threshold = float(np.percentile(calibration, 95))

    def forward(self, box_lists, com_srcs_to_det, com_tgts_to_det,
                attack_src, attack_tgt, def_src, def_tgt):
        # box_lists: (K+1, B, D) device array (stand-in for multi_com_forward +
        # post_process).  Pair metadata is host numpy.
        box_lists = jnp.asarray(box_lists, jnp.float32)
        Kp1, B, D = box_lists.shape
        K = Kp1 - 1
        def_src_np = np.asarray(def_src)
        def_tgt_np = np.asarray(def_tgt)
        P = def_src_np.shape[0]

        meta, det_cols = _pack_meta(com_srcs_to_det, com_tgts_to_det,
                                    def_src_np, def_tgt_np,
                                    int(attack_src), int(attack_tgt),
                                    self.threshold)
        boxes = box_lists.reshape(1, Kp1 * B, D)          # single-scenario batch (S=1)

        out = _device_forward(boxes, meta, det_cols, K=K, B=B)
        out = jax.block_until_ready(out)                  # single sync
        out_np = np.asarray(jax.device_get(out))[0]       # one packed transfer, (4, 128)

        scores = out_np[0, :K].astype(np.float32)
        pred = (out_np[1, :K] > 0.5).astype(np.int64)
        label = (out_np[2, :K] > 0.5).astype(np.int64)
        keep_mask = out_np[3, :P] > 0.5

        total = int(K)
        correct = int((label == pred).sum())

        # host glue: rm_com_pair (dynamic-size boolean filtering of pairs)
        com_src = def_src_np[keep_mask]
        com_tgt = def_tgt_np[keep_mask]

        info = {'score': scores, 'label': label, 'pred': pred}
        return com_src, com_tgt, total, correct, info


# ----------------------------------------------------------------------------
if __name__ == "__main__":
    key = jax.random.PRNGKey(0)
    num_agents = 4
    K = 8      # rm1 com-pairs under test
    B = 16     # boxes per detection result
    D = 8      # box parameters

    # synthetic stand-in for model.multi_com_forward -> post_process outputs
    box_lists = jax.random.normal(key, (K + 1, B, D), dtype=jnp.float32)
    # perturb the results corresponding to the attacked com pairs
    box_lists = box_lists.at[jnp.array([1, 4, 7])].add(25.0)

    # com pairs evaluated by the rm1 scheme (agent-id src -> ego tgt)
    com_srcs_to_det = np.array([1, 2, 3, 1, 2, 3, 1, 2], dtype=np.int32)
    com_tgts_to_det = np.zeros((K,), dtype=np.int32)
    attack_src, attack_tgt = 1, 0

    # default communication graph: all ordered (src, tgt) pairs, src != tgt
    pairs = [(s, t) for s in range(num_agents) for t in range(num_agents) if s != t]
    def_src = np.array([p[0] for p in pairs], dtype=np.int32)
    def_tgt = np.array([p[1] for p in pairs], dtype=np.int32)

    detector = MatchCostDetectorRM1()
    com_src, com_tgt, total, correct, info = detector.forward(
        box_lists, com_srcs_to_det, com_tgts_to_det,
        attack_src, attack_tgt, def_src, def_tgt)

    # --- checks against a pure-numpy reference -------------------------------
    bl = np.asarray(box_lists)
    ego_np = bl[0]
    ref_scores = []
    for k in range(K):
        diff = bl[k + 1][:, None, :] - ego_np[None, :, :]
        d2 = (diff * diff).sum(-1)                        # (B, B)
        ref_scores.append(d2.min(axis=1).mean())
    ref_scores = np.array(ref_scores, np.float32)
    np.testing.assert_allclose(info['score'], ref_scores, rtol=2e-2, atol=0.5)

    thr32 = np.float32(detector.threshold)
    np.testing.assert_array_equal(info['pred'],
                                  (info['score'] > thr32).astype(np.int64))
    assert info['score'].shape == (K,)
    assert info['pred'].shape == (K,) and info['label'].shape == (K,)
    assert total == K and 0 <= correct <= total
    assert bool(np.all(info['pred'][[0, 3, 6]] == 1))     # attacked pairs detected
    assert bool(np.all(info['label'][[0, 3, 6]] == 1))
    assert com_src.shape == com_tgt.shape and com_src.shape[0] <= def_src.shape[0]

    # --- batched-scenario path: parallel grid amortizes launch overhead -------
    S = 4
    boxes_b = jnp.broadcast_to(box_lists.reshape(1, (K + 1) * B, D),
                               (S, (K + 1) * B, D))
    meta_b, det_cols_b = _pack_meta(com_srcs_to_det, com_tgts_to_det,
                                    def_src, def_tgt,
                                    attack_src, attack_tgt, detector.threshold)
    out_b = jax.block_until_ready(
        _device_forward(boxes_b, meta_b, det_cols_b, K=K, B=B))
    out_b = np.asarray(jax.device_get(out_b))
    assert out_b.shape == (S, 4, _LANES)
    np.testing.assert_allclose(out_b[0], out_b[-1], rtol=1e-6, atol=1e-6)
    np.testing.assert_allclose(out_b[0, 0, :K], info['score'], rtol=1e-6, atol=1e-6)

    print("KERNEL_OK")
</pallas_src>

<mosaic_0001>
module attributes {stable_mosaic.version = 11 : i64} {
  func.func @_match_detect_kernel(%arg0: i32, %arg1: memref<1x144x8xf32, #tpu.memory_space<vmem>>, %arg2: memref<8x128xf32, #tpu.memory_space<vmem>>, %arg3: memref<8x2xf32, #tpu.memory_space<vmem>>, %arg4: memref<1x4x128xf32, #tpu.memory_space<vmem>>) attributes {dimension_semantics = [#tpu.dimension_semantics<parallel>], iteration_bounds = array<i64: 1>, scalar_prefetch = 0 : i64, scratch_operands = 0 : i64, tpu.core_type = #tpu.core_type<tc>, window_params = [{transform_indices = @transform_0, window_bounds = array<i64: 1, 144, 8>}, {pipeline_mode = #tpu.pipeline_mode<synchronous>, transform_indices = @transform_1, window_bounds = array<i64: 8, 128>}, {pipeline_mode = #tpu.pipeline_mode<synchronous>, transform_indices = @transform_2, window_bounds = array<i64: 8, 2>}, {transform_indices = @transform_3, window_bounds = array<i64: 1, 4, 128>}]} {
    %c0 = arith.constant 0 : index
    %c0_0 = arith.constant 0 : index
    %c0_1 = arith.constant 0 : index
    %0 = vector.load %arg1[%c0, %c0_0, %c0_1] : memref<1x144x8xf32, #tpu.memory_space<vmem>>, vector<1x16x8xf32>
    %1 = vector.shape_cast %0 : vector<1x16x8xf32> to vector<16x8xf32>
    %c0_2 = arith.constant 0 : index
    %c16 = arith.constant 16 : index
    %c0_3 = arith.constant 0 : index
    %2 = vector.load %arg1[%c0_2, %c16, %c0_3] : memref<1x144x8xf32, #tpu.memory_space<vmem>>, vector<1x128x8xf32>
    %3 = vector.shape_cast %2 : vector<1x128x8xf32> to vector<128x8xf32>
    %cst = arith.constant dense<0.000000e+00> : vector<16x128xf32>
    %4 = tpu.matmul %1, %3, %cst {dimension_numbers = #tpu.dot_dimension_numbers<[1], [1], [0], [0], [0, 0, 1, 0], [], []>} : vector<16x8xf32>, vector<128x8xf32>, vector<16x128xf32> -> vector<16x128xf32>
    %5 = arith.mulf %1, %1 : vector<16x8xf32>
    %cst_4 = arith.constant dense<0.000000e+00> : vector<16xf32>
    %6 = vector.multi_reduction <add>, %5, %cst_4 [1] : vector<16x8xf32> to vector<16xf32>
    %7 = vector.shape_cast %6 : vector<16xf32> to vector<16x1xf32>
    %cst_5 = arith.constant 1.000000e+00 : f32
    %8 = vector.broadcast %cst_5 : f32 to vector<1x8xf32>
    %9 = arith.mulf %3, %3 : vector<128x8xf32>
    %cst_6 = arith.constant dense<0.000000e+00> : vector<1x128xf32>
    %10 = tpu.matmul %8, %9, %cst_6 {dimension_numbers = #tpu.dot_dimension_numbers<[1], [1], [0], [0], [0, 0, 1, 0], [], []>} : vector<1x8xf32>, vector<128x8xf32>, vector<1x128xf32> -> vector<1x128xf32>
    %11 = vector.broadcast %7 : vector<16x1xf32> to vector<16x128xf32>
    %12 = vector.broadcast %10 : vector<1x128xf32> to vector<16x128xf32>
    %13 = arith.addf %11, %12 : vector<16x128xf32>
    %cst_7 = arith.constant 2.000000e+00 : f32
    %14 = vector.broadcast %cst_7 : f32 to vector<16x128xf32>
    %15 = arith.mulf %14, %4 : vector<16x128xf32>
    %16 = arith.subf %13, %15 : vector<16x128xf32>
    %cst_8 = arith.constant 0.000000e+00 : f32
    %17 = vector.broadcast %cst_8 : f32 to vector<16x128xf32>
    %18 = arith.maximumf %16, %17 : vector<16x128xf32>
    %cst_9 = arith.constant dense<0x7F800000> : vector<128xf32>
    %19 = vector.multi_reduction <minimumf>, %18, %cst_9 [0] : vector<16x128xf32> to vector<128xf32>
    %20 = vector.shape_cast %19 : vector<128xf32> to vector<1x128xf32>
    %21 = tpu.iota {dimensions = array<i32: 0>} : vector<128x1xi32>
    %22 = tpu.iota {dimensions = array<i32: 1>} : vector<1x128xi32>
    %c16_i32 = arith.constant 16 : i32
    %23 = vector.broadcast %c16_i32 : i32 to vector<1x128xi32>
    %24 = arith.muli %22, %23 : vector<1x128xi32>
    %25 = vector.broadcast %21 : vector<128x1xi32> to vector<128x128xi32>
    %26 = vector.broadcast %24 : vector<1x128xi32> to vector<128x128xi32>
    %27 = arith.cmpi sge, %25, %26 : vector<128x128xi32>
    %c1_i32 = arith.constant 1 : i32
    %28 = vector.broadcast %c1_i32 : i32 to vector<1x128xi32>
    %29 = arith.addi %22, %28 : vector<1x128xi32>
    %c16_i32_10 = arith.constant 16 : i32
    %30 = vector.broadcast %c16_i32_10 : i32 to vector<1x128xi32>
    %31 = arith.muli %29, %30 : vector<1x128xi32>
    %32 = vector.broadcast %21 : vector<128x1xi32> to vector<128x128xi32>
    %33 = vector.broadcast %31 : vector<1x128xi32> to vector<128x128xi32>
    %34 = arith.cmpi slt, %32, %33 : vector<128x128xi32>
    %35 = arith.andi %27, %34 : vector<128x128xi1>
    %cst_11 = arith.constant 6.250000e-02 : f32
    %cst_12 = arith.constant 0.000000e+00 : f32
    %36 = vector.broadcast %cst_11 : f32 to vector<128x128xf32>
    %37 = vector.broadcast %cst_12 : f32 to vector<128x128xf32>
    %38 = arith.select %35, %36, %37 : vector<128x128xi1>, vector<128x128xf32>
    %cst_13 = arith.constant dense<0.000000e+00> : vector<1x128xf32>
    %39 = tpu.matmul %20, %38, %cst_13 {dimension_numbers = #tpu.dot_dimension_numbers<[1], [0], [0], [1], [0, 0, 1, 1], [], []>} : vector<1x128xf32>, vector<128x128xf32>, vector<1x128xf32> -> vector<1x128xf32>
    %c0_14 = arith.constant 0 : index
    %c0_15 = arith.constant 0 : index
    %40 = vector.load %arg2[%c0_14, %c0_15] : memref<8x128xf32, #tpu.memory_space<vmem>>, vector<8x128xf32>
    %41 = vector.extract_strided_slice %40 {offsets = [0, 0], sizes = [1, 128], strides = [1, 1]} : vector<8x128xf32> to vector<1x128xf32>
    %42 = vector.extract_strided_slice %40 {offsets = [1, 0], sizes = [1, 128], strides = [1, 1]} : vector<8x128xf32> to vector<1x128xf32>
    %43 = vector.extract_strided_slice %40 {offsets = [2, 0], sizes = [1, 128], strides = [1, 1]} : vector<8x128xf32> to vector<1x128xf32>
    %44 = vector.extract_strided_slice %40 {offsets = [3, 0], sizes = [1, 128], strides = [1, 1]} : vector<8x128xf32> to vector<1x128xf32>
    %45 = vector.extract_strided_slice %40 {offsets = [4, 0], sizes = [1, 128], strides = [1, 1]} : vector<8x128xf32> to vector<1x128xf32>
    %46 = vector.extract_strided_slice %40 {offsets = [5, 0], sizes = [1, 128], strides = [1, 1]} : vector<8x128xf32> to vector<1x128xf32>
    %47 = vector.extract_strided_slice %40 {offsets = [6, 0], sizes = [1, 128], strides = [1, 1]} : vector<8x128xf32> to vector<1x128xf32>
    %c8_i32 = arith.constant 8 : i32
    %48 = vector.broadcast %c8_i32 : i32 to vector<1x128xi32>
    %49 = arith.cmpi slt, %22, %48 : vector<1x128xi32>
    %50 = arith.cmpf ogt, %39, %45 : vector<1x128xf32>
    %51 = arith.andi %50, %49 : vector<1x128xi1>
    %52 = arith.extui %51 : vector<1x128xi1> to vector<1x128xi32>
    %53 = arith.sitofp %52 : vector<1x128xi32> to vector<1x128xf32>
    %54 = arith.cmpf oeq, %41, %46 : vector<1x128xf32>
    %55 = arith.cmpf oeq, %42, %47 : vector<1x128xf32>
    %56 = arith.andi %54, %55 : vector<1x128xi1>
    %cst_16 = arith.constant 1.000000e+00 : f32
    %cst_17 = arith.constant 0.000000e+00 : f32
    %57 = vector.broadcast %cst_16 : f32 to vector<1x128xf32>
    %58 = vector.broadcast %cst_17 : f32 to vector<1x128xf32>
    %59 = arith.select %56, %57, %58 : vector<1x128xi1>, vector<1x128xf32>
    %c0_18 = arith.constant 0 : index
    %c0_19 = arith.constant 0 : index
    %60 = vector.load %arg3[%c0_18, %c0_19] : memref<8x2xf32, #tpu.memory_space<vmem>>, vector<8x2xf32>
    %61 = vector.extract_strided_slice %60 {offsets = [0, 0], sizes = [8, 1], strides = [1, 1]} : vector<8x2xf32> to vector<8x1xf32>
    %62 = vector.extract_strided_slice %60 {offsets = [0, 1], sizes = [8, 1], strides = [1, 1]} : vector<8x2xf32> to vector<8x1xf32>
    %63 = vector.broadcast %61 : vector<8x1xf32> to vector<8x128xf32>
    %64 = vector.broadcast %43 : vector<1x128xf32> to vector<8x128xf32>
    %65 = arith.cmpf oeq, %63, %64 : vector<8x128xf32>
    %66 = vector.broadcast %62 : vector<8x1xf32> to vector<8x128xf32>
    %67 = vector.broadcast %44 : vector<1x128xf32> to vector<8x128xf32>
    %68 = arith.cmpf oeq, %66, %67 : vector<8x128xf32>
    %69 = arith.andi %65, %68 : vector<8x128xi1>
    %cst_20 = arith.constant 1.000000e+00 : f32
    %cst_21 = arith.constant 0.000000e+00 : f32
    %70 = vector.broadcast %cst_20 : f32 to vector<8x128xf32>
    %71 = vector.broadcast %cst_21 : f32 to vector<8x128xf32>
    %72 = arith.select %69, %70, %71 : vector<8x128xi1>, vector<8x128xf32>
    %73 = vector.extract_strided_slice %53 {offsets = [0, 0], sizes = [1, 8], strides = [1, 1]} : vector<1x128xf32> to vector<1x8xf32>
    %cst_22 = arith.constant dense<0.000000e+00> : vector<1x128xf32>
    %74 = tpu.matmul %73, %72, %cst_22 {dimension_numbers = #tpu.dot_dimension_numbers<[1], [0], [0], [1], [0, 0, 1, 1], [], []>} : vector<1x8xf32>, vector<8x128xf32>, vector<1x128xf32> -> vector<1x128xf32>
    %cst_23 = arith.constant 5.000000e-01 : f32
    %75 = vector.broadcast %cst_23 : f32 to vector<1x128xf32>
    %76 = arith.cmpf ogt, %74, %75 : vector<1x128xf32>
    %cst_24 = arith.constant 0.000000e+00 : f32
    %cst_25 = arith.constant 1.000000e+00 : f32
    %77 = vector.broadcast %cst_24 : f32 to vector<1x128xf32>
    %78 = vector.broadcast %cst_25 : f32 to vector<1x128xf32>
    %79 = arith.select %76, %77, %78 : vector<1x128xi1>, vector<1x128xf32>
    %80 = tpu.iota {dimensions = array<i32: 0>} : vector<4x128xi32>
    %c0_i32 = arith.constant 0 : i32
    %81 = vector.broadcast %c0_i32 : i32 to vector<4x128xi32>
    %82 = arith.cmpi eq, %80, %81 : vector<4x128xi32>
    %c1_i32_26 = arith.constant 1 : i32
    %83 = vector.broadcast %c1_i32_26 : i32 to vector<4x128xi32>
    %84 = arith.cmpi eq, %80, %83 : vector<4x128xi32>
    %c2_i32 = arith.constant 2 : i32
    %85 = vector.broadcast %c2_i32 : i32 to vector<4x128xi32>
    %86 = arith.cmpi eq, %80, %85 : vector<4x128xi32>
    %87 = vector.shape_cast %59 : vector<1x128xf32> to vector<1x128xf32>
    %88 = vector.broadcast %87 : vector<1x128xf32> to vector<4x128xf32>
    %89 = vector.shape_cast %79 : vector<1x128xf32> to vector<1x128xf32>
    %90 = vector.broadcast %89 : vector<1x128xf32> to vector<4x128xf32>
    %91 = arith.select %86, %88, %90 : vector<4x128xi1>, vector<4x128xf32>
    %92 = vector.shape_cast %53 : vector<1x128xf32> to vector<1x128xf32>
    %93 = vector.broadcast %92 : vector<1x128xf32> to vector<4x128xf32>
    %94 = arith.select %84, %93, %91 : vector<4x128xi1>, vector<4x128xf32>
    %95 = vector.shape_cast %39 : vector<1x128xf32> to vector<1x128xf32>
    %96 = vector.broadcast %95 : vector<1x128xf32> to vector<4x128xf32>
    %97 = arith.select %82, %96, %94 : vector<4x128xi1>, vector<4x128xf32>
    %c0_27 = arith.constant 0 : index
    %c0_28 = arith.constant 0 : index
    %c0_29 = arith.constant 0 : index
    %98 = vector.load %arg4[%c0_27, %c0_28, %c0_29] : memref<1x4x128xf32, #tpu.memory_space<vmem>>, vector<1x4x128xf32>
    %99 = vector.shape_cast %98 : vector<1x4x128xf32> to vector<4x128xf32>
    %100 = vector.shape_cast %97 : vector<4x128xf32> to vector<1x4x128xf32>
    tpu.vector_store %arg4[%c0_27, %c0_28, %c0_29], %100 {strides = array<i32>} : memref<1x4x128xf32, #tpu.memory_space<vmem>>, vector<1x4x128xf32>,
    return
  }
  func.func @transform_0(%arg0: i32) -> (i32, i32, i32) {
    %c0_i32 = arith.constant 0 : i32
    %c0_i32_0 = arith.constant 0 : i32
    %c0_i32_1 = arith.constant 0 : i32
    return %arg0, %c0_i32, %c0_i32_0 : i32, i32, i32
  }
  func.func @transform_1(%arg0: i32) -> (i32, i32) {
    %c0_i32 = arith.constant 0 : i32
    %c0_i32_0 = arith.constant 0 : i32
    %c0_i32_1 = arith.constant 0 : i32
    return %c0_i32, %c0_i32_0 : i32, i32
  }
  func.func @transform_2(%arg0: i32) -> (i32, i32) {
    %c0_i32 = arith.constant 0 : i32
    %c0_i32_0 = arith.constant 0 : i32
    %c0_i32_1 = arith.constant 0 : i32
    return %c0_i32, %c0_i32_0 : i32, i32
  }
  func.func @transform_3(%arg0: i32) -> (i32, i32, i32) {
    %c0_i32 = arith.constant 0 : i32
    %c0_i32_0 = arith.constant 0 : i32
    %c0_i32_1 = arith.constant 0 : i32
    return %arg0, %c0_i32, %c0_i32_0 : i32, i32, i32
  }
}

</mosaic_0001>

<llo_original>
// kernel: _device_forward.1
$region0: #{_device_forward.1}
  #allocation0 [shape = 'u32[]', space=smem, size = 0x4, offset = 0x4, fixed_abs, tag = 'smem constant byte address 0x4 - core index']
  #allocation1 [shape = 'u32[144,128]{1,0:T(1,128)}', space=vmem, size = 0x12000, scoped, tag = 'internal scratch']
  %s0 = inlined_call_operand.vmem [shape: f32[1,144,8], index: 0, kind: input, shape index: {}]
  %s1 = inlined_call_operand.vmem [shape: f32[8,128], index: 1, kind: input, shape index: {}]
  %s2 = inlined_call_operand.vmem [shape: f32[8,2], index: 2, kind: input, shape index: {}]
  %s3 = inlined_call_operand.hbm [shape: f32[1,4,128], index: 3, kind: output, shape index: {}]
  %s4 = sld [smem:[#allocation0]]
  $region22: #{_device_forward.1} parent=0
    _
  %s6 = ssub.s32 1, %s4
  %s7 = scalar_select 0, %s6, %s4
  $region1: #{_device_forward.1} parent=0
    #allocation2 [shape = 'u8[2048]{0}', space=vmem, size = 0x800, scoped, tag = 'output window, operand 0, single buffered']
    #allocation3 [shape = 's32[1]{0}', space=sflag, size = 0x4, scoped, tag = 'scoped memory for _device_forward.1']
    %8 = vsyncpa [#allocation3], 0
    // Predicated region
    $region2: #{_device_forward.1} parent=1 // pred_check
      _
    $region3: #{_device_forward.1} parent=1 // pred_check_branch
      %10 = sbr.rel (0) target = $region5
    $region4: #{_device_forward.1} parent=1 // pred_region
      _
    $region5: #{_device_forward.1} parent=1 // pred_fallthru
      _
    // Predicated region
    $region6: #{_device_forward.1} parent=1 // pred_check
      _
    $region7: #{_device_forward.1} parent=1 // pred_check_branch
      %12 = sbr.rel (0) target = $region9
    $region8: #{_device_forward.1} parent=1 // pred_region
      _
    $region9: #{_device_forward.1} parent=1 // pred_fallthru
      _
    // Predicated region
    $region10: #{_device_forward.1} parent=1 // pred_check
      _
    $region11: #{_device_forward.1} parent=1 // pred_check_branch
      %14 = sbr.rel (0) target = $region13
    $region12: #{_device_forward.1} parent=1 // pred_region
      _
    $region13: #{_device_forward.1} parent=1 // pred_fallthru
      _
    %v15 = vld [vmem:[%s0] sm:$0xff]
    %v16 = vld [vmem:[%s0 + $0x8] sm:$0xff]
    %v17 = vld [vmem:[%s0 + $0x10] sm:$0xff]
    %v18 = vld [vmem:[%s0 + $0x18] sm:$0xff]
    %v19 = vld [vmem:[%s0 + $0x20] sm:$0xff]
    %v20 = vld [vmem:[%s0 + $0x28] sm:$0xff]
    %v21 = vld [vmem:[%s0 + $0x30] sm:$0xff]
    %v22 = vld [vmem:[%s0 + $0x38] sm:$0xff]
    %v23 = vld [vmem:[%s0 + $0x40] sm:$0xff]
    %v24 = vld [vmem:[%s0 + $0x48] sm:$0xff]
    %v25 = vld [vmem:[%s0 + $0x50] sm:$0xff]
    %v26 = vld [vmem:[%s0 + $0x58] sm:$0xff]
    %v27 = vld [vmem:[%s0 + $0x60] sm:$0xff]
    %v28 = vld [vmem:[%s0 + $0x68] sm:$0xff]
    %v29 = vld [vmem:[%s0 + $0x70] sm:$0xff]
    %v30 = vld [vmem:[%s0 + $0x78] sm:$0xff]
    %v31 = vld [vmem:[%s0 + $0x80] sm:$0xff]
    %v32 = vld [vmem:[%s0 + $0x88] sm:$0xff]
    %vm33 = vcmask 64512
    %v35 = vsel %vm33, %v15, 0
    %v38 = vsel %vm33, %v16, 0
    %v41 = vsel %vm33, %v17, 0
    %v44 = vsel %vm33, %v18, 0
    %v47 = vsel %vm33, %v19, 0
    %v50 = vsel %vm33, %v20, 0
    %v53 = vsel %vm33, %v21, 0
    %v56 = vsel %vm33, %v22, 0
    %v59 = vsel %vm33, %v23, 0
    %v62 = vsel %vm33, %v24, 0
    %v65 = vsel %vm33, %v25, 0
    %v68 = vsel %vm33, %v26, 0
    %v71 = vsel %vm33, %v27, 0
    %v74 = vsel %vm33, %v28, 0
    %v77 = vsel %vm33, %v29, 0
    %v80 = vsel %vm33, %v30, 0
    %v83 = vsel %vm33, %v31, 0
    %v86 = vsel %vm33, %v32, 0
    %88 = vmatprep.subr.mxu0 0.0
    %89 = vmatpush1.xpose.msra.mxu0 %v41
    %90 = vmatprep.subr.mxu0 0.0
    %91 = vmatpush1.xpose.msra.mxu0 %v44
    %92 = vmatprep.subr.mxu0 0.0
    %93 = vmatpush1.xpose.msra.mxu0 %v47
    %94 = vmatprep.subr.mxu0 0.0
    %95 = vmatpush1.xpose.msra.mxu0 %v50
    %96 = vmatprep.subr.mxu0 0.0
    %97 = vmatpush1.xpose.msra.mxu0 %v53
    %98 = vmatprep.subr.mxu0 0.0
    %99 = vmatpush1.xpose.msra.mxu0 %v56
    %100 = vmatprep.subr.mxu0 0.0
    %101 = vmatpush1.xpose.msra.mxu0 %v59
    %102 = vmatprep.subr.mxu0 0.0
    %103 = vmatpush1.xpose.msra.mxu0 %v62
    %104 = vmatprep.subr.mxu0 0.0
    %105 = vmatpush1.xpose.msra.mxu0 %v65
    %106 = vmatprep.subr.mxu0 0.0
    %107 = vmatpush1.xpose.msra.mxu0 %v68
    %108 = vmatprep.subr.mxu0 0.0
    %109 = vmatpush1.xpose.msra.mxu0 %v71
    %110 = vmatprep.subr.mxu0 0.0
    %111 = vmatpush1.xpose.msra.mxu0 %v74
    %112 = vmatprep.subr.mxu0 0.0
    %113 = vmatpush1.xpose.msra.mxu0 %v77
    %114 = vmatprep.subr.mxu0 0.0
    %115 = vmatpush1.xpose.msra.mxu0 %v80
    %116 = vmatprep.subr.mxu0 0.0
    %117 = vmatpush1.xpose.msra.mxu0 %v83
    %118 = vmatprep.subr.mxu0 0.0
    %119 = vmatpush1.xpose.msra.mxu0 %v86
    %120 = vmatprep.subr.mxu0 0.0
    %121 = vmatpush1.xpose.msra.mxu0 0.0
    %122 = vmatprep.subr.mxu0 0.0
    %123 = vmatpush1.xpose.msra.mxu0 0.0
    %124 = vmatprep.subr.mxu0 0.0
    %125 = vmatpush1.xpose.msra.mxu0 0.0
    %126 = vmatprep.subr.mxu0 0.0
    %127 = vmatpush1.xpose.msra.mxu0 0.0
    %128 = vmatprep.subr.mxu0 0.0
    %129 = vmatpush1.xpose.msra.mxu0 0.0
    %130 = vmatprep.subr.mxu0 0.0
    %131 = vmatpush1.xpose.msra.mxu0 0.0
    %132 = vmatprep.subr.mxu0 0.0
    %133 = vmatpush1.xpose.msra.mxu0 0.0
    %134 = vmatprep.subr.mxu0 0.0
    %135 = vmatpush1.xpose.msra.mxu0 0.0
    %136 = vmatprep.subr.mxu0 0.0
    %137 = vmatpush1.xpose.msra.mxu0 0.0
    %138 = vmatprep.subr.mxu0 0.0
    %139 = vmatpush1.xpose.msra.mxu0 0.0
    %140 = vmatprep.subr.mxu0 0.0
    %141 = vmatpush1.xpose.msra.mxu0 0.0
    %142 = vmatprep.subr.mxu0 0.0
    %143 = vmatpush1.xpose.msra.mxu0 0.0
    %144 = vmatprep.subr.mxu0 0.0
    %145 = vmatpush1.xpose.msra.mxu0 0.0
    %146 = vmatprep.subr.mxu0 0.0
    %147 = vmatpush1.xpose.msra.mxu0 0.0
    %148 = vmatprep.subr.mxu0 0.0
    %149 = vmatpush1.xpose.msra.mxu0 0.0
    %150 = vmatprep.subr.mxu0 0.0
    %151 = vmatpush1.xpose.msra.mxu0 0.0
    %152 = vmatprep.mubr.f32.mxu0 0.0
    %153 = vmatmul.mubr.f32.gmra.mrb[0].mxu0 %v35
    %v154 = vpop.f32.mrb[0].mxu0
    %v155 = vadd.f32 0.0, %v154
    %v156 = vpop.f32.mrb[0].mxu0
    %157 = vmatprep.mubr.f32.mxu0 0.0
    %158 = vmatmul.mubr.f32.gmra.mrb[0].mxu0 %v38
    %v159 = vpop.f32.mrb[0].mxu0
    %v160 = vadd.f32 0.0, %v159
    %v161 = vpop.f32.mrb[0].mxu0
    %162 = vdwg.mxu0
    %v163 = vmul.f32 %v15, %v15
    %v164 = vmul.f32 %v16, %v16
    %v165 = vsel %vm33, %v163, 0.0
    %166 = vadd.xlane.f32.xlu0 %v165
    %v167 = vpop.xlane.xlu0 %166
    %v168 = vsel %vm33, %v164, 0.0
    %169 = vadd.xlane.f32.xlu0 %v168
    %v170 = vpop.xlane.xlu0 %169
    %v171 = vmul.f32 %v17, %v17
    %v172 = vmul.f32 %v18, %v18
    %v173 = vmul.f32 %v19, %v19
    %v174 = vmul.f32 %v20, %v20
    %v175 = vmul.f32 %v21, %v21
    %v176 = vmul.f32 %v22, %v22
    %v177 = vmul.f32 %v23, %v23
    %v178 = vmul.f32 %v24, %v24
    %v179 = vmul.f32 %v25, %v25
    %v180 = vmul.f32 %v26, %v26
    %v181 = vmul.f32 %v27, %v27
    %v182 = vmul.f32 %v28, %v28
    %v183 = vmul.f32 %v29, %v29
    %v184 = vmul.f32 %v30, %v30
    %v185 = vmul.f32 %v31, %v31
    %v186 = vmul.f32 %v32, %v32
    %v188 = vsel %vm33, 1.0, 0
    %v191 = vsel %vm33, %v171, 0
    %v194 = vsel %vm33, %v172, 0
    %v197 = vsel %vm33, %v173, 0
    %v200 = vsel %vm33, %v174, 0
    %v203 = vsel %vm33, %v175, 0
    %v206 = vsel %vm33, %v176, 0
    %v209 = vsel %vm33, %v177, 0
    %v212 = vsel %vm33, %v178, 0
    %v215 = vsel %vm33, %v179, 0
    %v218 = vsel %vm33, %v180, 0
    %v221 = vsel %vm33, %v181, 0
    %v224 = vsel %vm33, %v182, 0
    %v227 = vsel %vm33, %v183, 0
    %v230 = vsel %vm33, %v184, 0
    %v233 = vsel %vm33, %v185, 0
    %v236 = vsel %vm33, %v186, 0
    %238 = vmatprep.subr.mxu0 0.0
    %239 = vmatpush1.xpose.msra.mxu0 %v191
    %240 = vmatprep.subr.mxu0 0.0
    %241 = vmatpush1.xpose.msra.mxu0 %v194
    %242 = vmatprep.subr.mxu0 0.0
    %243 = vmatpush1.xpose.msra.mxu0 %v197
    %244 = vmatprep.subr.mxu0 0.0
    %245 = vmatpush1.xpose.msra.mxu0 %v200
    %246 = vmatprep.subr.mxu0 0.0
    %247 = vmatpush1.xpose.msra.mxu0 %v203
    %248 = vmatprep.subr.mxu0 0.0
    %249 = vmatpush1.xpose.msra.mxu0 %v206
    %250 = vmatprep.subr.mxu0 0.0
    %251 = vmatpush1.xpose.msra.mxu0 %v209
    %252 = vmatprep.subr.mxu0 0.0
    %253 = vmatpush1.xpose.msra.mxu0 %v212
    %254 = vmatprep.subr.mxu0 0.0
    %255 = vmatpush1.xpose.msra.mxu0 %v215
    %256 = vmatprep.subr.mxu0 0.0
    %257 = vmatpush1.xpose.msra.mxu0 %v218
    %258 = vmatprep.subr.mxu0 0.0
    %259 = vmatpush1.xpose.msra.mxu0 %v221
    %260 = vmatprep.subr.mxu0 0.0
    %261 = vmatpush1.xpose.msra.mxu0 %v224
    %262 = vmatprep.subr.mxu0 0.0
    %263 = vmatpush1.xpose.msra.mxu0 %v227
    %264 = vmatprep.subr.mxu0 0.0
    %265 = vmatpush1.xpose.msra.mxu0 %v230
    %266 = vmatprep.subr.mxu0 0.0
    %267 = vmatpush1.xpose.msra.mxu0 %v233
    %268 = vmatprep.subr.mxu0 0.0
    %269 = vmatpush1.xpose.msra.mxu0 %v236
    %270 = vmatprep.subr.mxu0 0.0
    %271 = vmatpush1.xpose.msra.mxu0 0.0
    %272 = vmatprep.subr.mxu0 0.0
    %273 = vmatpush1.xpose.msra.mxu0 0.0
    %274 = vmatprep.subr.mxu0 0.0
    %275 = vmatpush1.xpose.msra.mxu0 0.0
    %276 = vmatprep.subr.mxu0 0.0
    %277 = vmatpush1.xpose.msra.mxu0 0.0
    %278 = vmatprep.subr.mxu0 0.0
    %279 = vmatpush1.xpose.msra.mxu0 0.0
    %280 = vmatprep.subr.mxu0 0.0
    %281 = vmatpush1.xpose.msra.mxu0 0.0
    %282 = vmatprep.subr.mxu0 0.0
    %283 = vmatpush1.xpose.msra.mxu0 0.0
    %284 = vmatprep.subr.mxu0 0.0
    %285 = vmatpush1.xpose.msra.mxu0 0.0
    %286 = vmatprep.subr.mxu0 0.0
    %287 = vmatpush1.xpose.msra.mxu0 0.0
    %288 = vmatprep.subr.mxu0 0.0
    %289 = vmatpush1.xpose.msra.mxu0 0.0
    %290 = vmatprep.subr.mxu0 0.0
    %291 = vmatpush1.xpose.msra.mxu0 0.0
    %292 = vmatprep.subr.mxu0 0.0
    %293 = vmatpush1.xpose.msra.mxu0 0.0
    %294 = vmatprep.subr.mxu0 0.0
    %295 = vmatpush1.xpose.msra.mxu0 0.0
    %296 = vmatprep.subr.mxu0 0.0
    %297 = vmatpush1.xpose.msra.mxu0 0.0
    %298 = vmatprep.subr.mxu0 0.0
    %299 = vmatpush1.xpose.msra.mxu0 0.0
    %300 = vmatprep.subr.mxu0 0.0
    %301 = vmatpush1.xpose.msra.mxu0 0.0
    %302 = vmatprep.mubr.f32.mxu0 0.0
    %303 = vmatmul.mubr.f32.gmra.mrb[0].mxu0 %v188
    %v304 = vpop.f32.mrb[0].mxu0
    %v305 = vadd.f32 0.0, %v304
    %v306 = vpop.f32.mrb[0].mxu0
    %307 = vdwg.mxu0
    %v308 = vlaneseq
    %v309 = vshrl.u32 %v308, 7
    %v310 = vsub.s32 0, %v309
    %v311 = vrot.slane %v305, %v310
    %v312 = vadd.f32 %v167, %v311
    %v313 = vadd.f32 %v170, %v311
    %v314 = vmul.f32 %v155, 2.0
    %v315 = vmul.f32 %v160, 2.0
    %v316 = vsub.f32 %v312, %v314
    %v317 = vsub.f32 %v313, %v315
    %v318 = vmax.f32 %v316, 0.0
    %v319 = vmax.f32 %v317, 0.0
    %v320 = vmin.f32 %v318, %v319
    %v321 = vrot.slane %v320, 4
    %v322 = vmin.f32 %v320, %v321
    %v323 = vrot.slane %v322, 2
    %v324 = vmin.f32 %v322, %v323
    %v325 = vrot.slane %v324, 1
    %v326 = vmin.f32 %v324, %v325
    %v327 = vlaneseq
    %v328 = vshrl.u32 %v327, 7
    %v329 = vadd.s32 %v328, 8
    %v330 = vadd.s32 %v328, 16
    %v331 = vadd.s32 %v328, 24
    %v332 = vadd.s32 %v328, 32
    %v333 = vadd.s32 %v328, 40
    %v334 = vadd.s32 %v328, 48
    %v335 = vadd.s32 %v328, 56
    %v336 = vadd.s32 %v328, 64
    %v337 = vadd.s32 %v328, 72
    %v338 = vadd.s32 %v328, 80
    %v339 = vadd.s32 %v328, 88
    %v340 = vadd.s32 %v328, 96
    %v341 = vadd.s32 %v328, 104
    %v342 = vadd.s32 %v328, 112
    %v343 = vadd.s32 %v328, 120
    %v344 = vlaneseq
    %v345 = vand.u32 %v344, 127
    %v346 = vmul.u32 %v345, 16
    %vm347 = vcmp.ge.s32.totalorder %v328, %v346
    %vm348 = vcmp.ge.s32.totalorder %v329, %v346
    %vm349 = vcmp.ge.s32.totalorder %v330, %v346
    %vm350 = vcmp.ge.s32.totalorder %v331, %v346
    %vm351 = vcmp.ge.s32.totalorder %v332, %v346
    %vm352 = vcmp.ge.s32.totalorder %v333, %v346
    %vm353 = vcmp.ge.s32.totalorder %v334, %v346
    %vm354 = vcmp.ge.s32.totalorder %v335, %v346
    %vm355 = vcmp.ge.s32.totalorder %v336, %v346
    %vm356 = vcmp.ge.s32.totalorder %v337, %v346
    %vm357 = vcmp.ge.s32.totalorder %v338, %v346
    %vm358 = vcmp.ge.s32.totalorder %v339, %v346
    %vm359 = vcmp.ge.s32.totalorder %v340, %v346
    %vm360 = vcmp.ge.s32.totalorder %v341, %v346
    %vm361 = vcmp.ge.s32.totalorder %v342, %v346
    %vm362 = vcmp.ge.s32.totalorder %v343, %v346
    %v363 = vadd.s32 %v345, 1
    %v364 = vmul.u32 %v363, 16
    %vm365 = vcmp.lt.s32.totalorder %v328, %v364
    %vm366 = vcmp.lt.s32.totalorder %v329, %v364
    %vm367 = vcmp.lt.s32.totalorder %v330, %v364
    %vm368 = vcmp.lt.s32.totalorder %v331, %v364
    %vm369 = vcmp.lt.s32.totalorder %v332, %v364
    %vm370 = vcmp.lt.s32.totalorder %v333, %v364
    %vm371 = vcmp.lt.s32.totalorder %v334, %v364
    %vm372 = vcmp.lt.s32.totalorder %v335, %v364
    %vm373 = vcmp.lt.s32.totalorder %v336, %v364
    %vm374 = vcmp.lt.s32.totalorder %v337, %v364
    %vm375 = vcmp.lt.s32.totalorder %v338, %v364
    %vm376 = vcmp.lt.s32.totalorder %v339, %v364
    %vm377 = vcmp.lt.s32.totalorder %v340, %v364
    %vm378 = vcmp.lt.s32.totalorder %v341, %v364
    %vm379 = vcmp.lt.s32.totalorder %v342, %v364
    %vm380 = vcmp.lt.s32.totalorder %v343, %v364
    %vm381 = vmand %vm347, %vm365
    %vm382 = vmand %vm348, %vm366
    %vm383 = vmand %vm349, %vm367
    %vm384 = vmand %vm350, %vm368
    %vm385 = vmand %vm351, %vm369
    %vm386 = vmand %vm352, %vm370
    %vm387 = vmand %vm353, %vm371
    %vm388 = vmand %vm354, %vm372
    %vm389 = vmand %vm355, %vm373
    %vm390 = vmand %vm356, %vm374
    %vm391 = vmand %vm357, %vm375
    %vm392 = vmand %vm358, %vm376
    %vm393 = vmand %vm359, %vm377
    %vm394 = vmand %vm360, %vm378
    %vm395 = vmand %vm361, %vm379
    %vm396 = vmand %vm362, %vm380
    %v397 = vsel %vm381, 0.0625, 0.0
    %v398 = vsel %vm382, 0.0625, 0.0
    %v399 = vsel %vm383, 0.0625, 0.0
    %v400 = vsel %vm384, 0.0625, 0.0
    %v401 = vsel %vm385, 0.0625, 0.0
    %v402 = vsel %vm386, 0.0625, 0.0
    %v403 = vsel %vm387, 0.0625, 0.0
    %v404 = vsel %vm388, 0.0625, 0.0
    %v405 = vsel %vm389, 0.0625, 0.0
    %v406 = vsel %vm390, 0.0625, 0.0
    %v407 = vsel %vm391, 0.0625, 0.0
    %v408 = vsel %vm392, 0.0625, 0.0
    %v409 = vsel %vm393, 0.0625, 0.0
    %v410 = vsel %vm394, 0.0625, 0.0
    %v411 = vsel %vm395, 0.0625, 0.0
    %v412 = vsel %vm396, 0.0625, 0.0
    %413 = vmatprep.subr.mxu0 0.0
    %414 = vmatpush1.msra.mxu0 %v397
    %415 = vmatprep.subr.mxu0 0.0
    %416 = vmatpush1.msra.mxu0 %v398
    %417 = vmatprep.subr.mxu0 0.0
    %418 = vmatpush1.msra.mxu0 %v399
    %419 = vmatprep.subr.mxu0 0.0
    %420 = vmatpush1.msra.mxu0 %v400
    %421 = vmatprep.subr.mxu0 0.0
    %422 = vmatpush1.msra.mxu0 %v401
    %423 = vmatprep.subr.mxu0 0.0
    %424 = vmatpush1.msra.mxu0 %v402
    %425 = vmatprep.subr.mxu0 0.0
    %426 = vmatpush1.msra.mxu0 %v403
    %427 = vmatprep.subr.mxu0 0.0
    %428 = vmatpush1.msra.mxu0 %v404
    %429 = vmatprep.subr.mxu0 0.0
    %430 = vmatpush1.msra.mxu0 %v405
    %431 = vmatprep.subr.mxu0 0.0
    %432 = vmatpush1.msra.mxu0 %v406
    %433 = vmatprep.subr.mxu0 0.0
    %434 = vmatpush1.msra.mxu0 %v407
    %435 = vmatprep.subr.mxu0 0.0
    %436 = vmatpush1.msra.mxu0 %v408
    %437 = vmatprep.subr.mxu0 0.0
    %438 = vmatpush1.msra.mxu0 %v409
    %439 = vmatprep.subr.mxu0 0.0
    %440 = vmatpush1.msra.mxu0 %v410
    %441 = vmatprep.subr.mxu0 0.0
    %442 = vmatpush1.msra.mxu0 %v411
    %443 = vmatprep.subr.mxu0 0.0
    %444 = vmatpush1.msra.mxu0 %v412
    %445 = vmatprep.subr.mxu0 0.0
    %446 = vmatpush1.msra.mxu0 0.0
    %447 = vmatprep.subr.mxu0 0.0
    %448 = vmatpush1.msra.mxu0 0.0
    %449 = vmatprep.subr.mxu0 0.0
    %450 = vmatpush1.msra.mxu0 0.0
    %451 = vmatprep.subr.mxu0 0.0
    %452 = vmatpush1.msra.mxu0 0.0
    %453 = vmatprep.subr.mxu0 0.0
    %454 = vmatpush1.msra.mxu0 0.0
    %455 = vmatprep.subr.mxu0 0.0
    %456 = vmatpush1.msra.mxu0 0.0
    %457 = vmatprep.subr.mxu0 0.0
    %458 = vmatpush1.msra.mxu0 0.0
    %459 = vmatprep.subr.mxu0 0.0
    %460 = vmatpush1.msra.mxu0 0.0
    %461 = vmatprep.subr.mxu0 0.0
    %462 = vmatpush1.msra.mxu0 0.0
    %463 = vmatprep.subr.mxu0 0.0
    %464 = vmatpush1.msra.mxu0 0.0
    %465 = vmatprep.subr.mxu0 0.0
    %466 = vmatpush1.msra.mxu0 0.0
    %467 = vmatprep.subr.mxu0 0.0
    %468 = vmatpush1.msra.mxu0 0.0
    %469 = vmatprep.subr.mxu0 0.0
    %470 = vmatpush1.msra.mxu0 0.0
    %471 = vmatprep.subr.mxu0 0.0
    %472 = vmatpush1.msra.mxu0 0.0
    %473 = vmatprep.subr.mxu0 0.0
    %474 = vmatpush1.msra.mxu0 0.0
    %475 = vmatprep.subr.mxu0 0.0
    %476 = vmatpush1.msra.mxu0 0.0
    %477 = vmatprep.mubr.f32.mxu0 0.0
    %478 = vmatmul.mubr.f32.gmra.mrb[0].mxu0 %v326
    %v479 = vpop.f32.mrb[0].mxu0
    %v480 = vadd.f32 0.0, %v479
    %v481 = vpop.f32.mrb[0].mxu0
    %482 = vdwg.mxu0
    %v483 = vld [vmem:[%s1] sm:$0xff]
    %vm484 = vcmp.lt.s32.totalorder %v345, 8
    %v486 = vrot.slane %v483, 4
    %vm488 = vcmp.gt.f32.partialorder %v480, %v486
    %vm489 = vmand %vm488, %vm484
    %v490 = vsel %vm489, 1, 0
    %v491 = vcvt.s32.f32 %v490
    %v492 = vrot.slane %v483, 5
    %vm494 = vcmp.eq.f32.partialorder %v483, %v492
    %v495 = vsel %vm494, 1, 0
    %v496 = vrot.slane %v495, 1
    %vm497 = vcmp.ne.s32.totalorder %v496, 0
    %vm498 = vmand %vm494, %vm497
    %v499 = vsel %vm498, 1.0, 0.0
    %v500 = vld [vmem:[%s2] sm:$0xff]
    %502 = vset.pattern.permute.xlu0 0
    %503 = vperm.xlu0 %502, %v500
    %v504 = vpop.permute.xlu0 %503
    %v506 = vlaneseq
    %v507 = vshrl.u32 %v506, 7
    %v508 = vsub.s32 2, %v507
    %v509 = vrot.slane %v483, %v508
    %vm510 = vcmp.eq.f32.partialorder %v504, %v509
    %511 = vset.pattern.permute.xlu0 1
    %512 = vperm.xlu0 %511, %v500
    %v513 = vpop.permute.xlu0 %512
    %v515 = vlaneseq
    %v516 = vshrl.u32 %v515, 7
    %v517 = vsub.s32 3, %v516
    %v518 = vrot.slane %v483, %v517
    %vm519 = vcmp.eq.f32.partialorder %v513, %v518
    %vm520 = vmand %vm510, %vm519
    %v521 = vsel %vm520, 1.0, 0.0
    %v523 = vsel %vm33, %v491, 0
    %525 = vmatprep.subr.mxu0 0.0
    %526 = vmatpush1.msra.mxu0 %v521
    %527 = vmatprep.subr.mxu0 0.0
    %528 = vmatpush1.msra.mxu0 0.0
    %529 = vmatprep.subr.mxu0 0.0
    %530 = vmatpush1.msra.mxu0 0.0
    %531 = vmatprep.subr.mxu0 0.0
    %532 = vmatpush1.msra.mxu0 0.0
    %533 = vmatprep.subr.mxu0 0.0
    %534 = vmatpush1.msra.mxu0 0.0
    %535 = vmatprep.subr.mxu0 0.0
    %536 = vmatpush1.msra.mxu0 0.0
    %537 = vmatprep.subr.mxu0 0.0
    %538 = vmatpush1.msra.mxu0 0.0
    %539 = vmatprep.subr.mxu0 0.0
    %540 = vmatpush1.msra.mxu0 0.0
    %541 = vmatprep.subr.mxu0 0.0
    %542 = vmatpush1.msra.mxu0 0.0
    %543 = vmatprep.subr.mxu0 0.0
    %544 = vmatpush1.msra.mxu0 0.0
    %545 = vmatprep.subr.mxu0 0.0
    %546 = vmatpush1.msra.mxu0 0.0
    %547 = vmatprep.subr.mxu0 0.0
    %548 = vmatpush1.msra.mxu0 0.0
    %549 = vmatprep.subr.mxu0 0.0
    %550 = vmatpush1.msra.mxu0 0.0
    %551 = vmatprep.subr.mxu0 0.0
    %552 = vmatpush1.msra.mxu0 0.0
    %553 = vmatprep.subr.mxu0 0.0
    %554 = vmatpush1.msra.mxu0 0.0
    %555 = vmatprep.subr.mxu0 0.0
    %556 = vmatpush1.msra.mxu0 0.0
    %557 = vmatprep.subr.mxu0 0.0
    %558 = vmatpush1.msra.mxu0 0.0
    %559 = vmatprep.subr.mxu0 0.0
    %560 = vmatpush1.msra.mxu0 0.0
    %561 = vmatprep.subr.mxu0 0.0
    %562 = vmatpush1.msra.mxu0 0.0
    %563 = vmatprep.subr.mxu0 0.0
    %564 = vmatpush1.msra.mxu0 0.0
    %565 = vmatprep.subr.mxu0 0.0
    %566 = vmatpush1.msra.mxu0 0.0
    %567 = vmatprep.subr.mxu0 0.0
    %568 = vmatpush1.msra.mxu0 0.0
    %569 = vmatprep.subr.mxu0 0.0
    %570 = vmatpush1.msra.mxu0 0.0
    %571 = vmatprep.subr.mxu0 0.0
    %572 = vmatpush1.msra.mxu0 0.0
    %573 = vmatprep.subr.mxu0 0.0
    %574 = vmatpush1.msra.mxu0 0.0
    %575 = vmatprep.subr.mxu0 0.0
    %576 = vmatpush1.msra.mxu0 0.0
    %577 = vmatprep.subr.mxu0 0.0
    %578 = vmatpush1.msra.mxu0 0.0
    %579 = vmatprep.subr.mxu0 0.0
    %580 = vmatpush1.msra.mxu0 0.0
    %581 = vmatprep.subr.mxu0 0.0
    %582 = vmatpush1.msra.mxu0 0.0
    %583 = vmatprep.subr.mxu0 0.0
    %584 = vmatpush1.msra.mxu0 0.0
    %585 = vmatprep.subr.mxu0 0.0
    %586 = vmatpush1.msra.mxu0 0.0
    %587 = vmatprep.subr.mxu0 0.0
    %588 = vmatpush1.msra.mxu0 0.0
    %589 = vmatprep.mubr.f32.mxu0 0.0
    %590 = vmatmul.mubr.f32.gmra.mrb[0].mxu0 %v523
    %v591 = vpop.f32.mrb[0].mxu0
    %v592 = vadd.f32 0.0, %v591
    %v593 = vpop.f32.mrb[0].mxu0
    %594 = vdwg.mxu0
    %vm595 = vcmp.gt.f32.partialorder %v592, 0.5
    %v596 = vsel %vm595, 0.0, 1.0
    %vm597 = vcmp.eq.s32.totalorder %v328, 0
    %vm598 = vcmp.eq.s32.totalorder %v328, 1
    %vm599 = vcmp.eq.s32.totalorder %v328, 2
    %v600 = vlaneseq
    %v601 = vshrl.u32 %v600, 7
    %v602 = vsub.s32 0, %v601
    %v603 = vrot.slane %v499, %v602
    %v604 = vlaneseq
    %v605 = vshrl.u32 %v604, 7
    %v606 = vsub.s32 0, %v605
    %v607 = vrot.slane %v596, %v606
    %v608 = vsel %vm599, %v603, %v607
    %v609 = vlaneseq
    %v610 = vshrl.u32 %v609, 7
    %v611 = vsub.s32 0, %v610
    %v612 = vrot.slane %v491, %v611
    %v613 = vsel %vm598, %v612, %v608
    %v614 = vlaneseq
    %v615 = vshrl.u32 %v614, 7
    %v616 = vsub.s32 0, %v615
    %v617 = vrot.slane %v480, %v616
    %v618 = vsel %vm597, %v617, %v613
    %619 = vst [vmem:[#allocation2] sm:$0xf] %v618
    // Predicated region
    $region14: #{_device_forward.1} parent=1 // pred_check
      _
    $region15: #{_device_forward.1} parent=1 // pred_check_branch
      %621 = sbr.rel (0) target = $region17
    $region16: #{_device_forward.1} parent=1 // pred_region
      %s623 = ssub.s32 64, 64
      %624 = vsyncadd [#allocation3], %s623
      %s626 = sshll.u32 [#allocation2], 4
      %s627 = int_to_ptr.vmem [resolvable:$true] %s626
      %629 = dma.vmem_to_hbm [thread:$0]  %s627, 64, %s3, [#allocation3]
    $region17: #{_device_forward.1} parent=1 // pred_fallthru
      _
    // Predicated region
    $region18: #{_device_forward.1} parent=1 // pred_check
      _
    $region19: #{_device_forward.1} parent=1 // pred_check_branch
      %631 = sbr.rel (0) target = $region21
    $region20: #{_device_forward.1} parent=1 // pred_region
      %632 = dma.done [#allocation3], 64
    $region21: #{_device_forward.1} parent=1 // pred_fallthru
      _
    %633 = vsyncpa [#allocation3], 1

</llo_original>
